<compile_context>
chip_gen: v5e
topology: v5e:2x2
jax: 0.10.0
libtpu: 0.0.40
codegen_flags: <defaults>
</compile_context>

<pallas_src>
import jax
import jax.numpy as jnp
from jax.experimental import pallas as pl
from jax.experimental.pallas import tpu as pltpu

LN_EPS = 1e-5
COMPUTE_DTYPE = jnp.bfloat16   # MXU-friendly on v6e/v7x; accumulation stays f32.


def _round_up(x, m):
    return (x + m - 1) // m * m


def actor_kernel(obs_ref, w1_ref, b1_ref, g_ref, beta_ref,
                 w2_ref, b2_ref, w3_ref, b3_ref, w4_ref, b4_ref,
                 mu_ref, acc_ref):
    """One (batch tile, K tile) grid step of the fused Actor forward."""
    k = pl.program_id(1)

    @pl.when(k == 0)
    def _():
        acc_ref[...] = jnp.zeros_like(acc_ref)

    # Trunk matmul, K-tiled:  acc += obs_tile @ w1_tile   (bf16 x bf16 -> f32)
    acc_ref[...] += jnp.dot(obs_ref[...], w1_ref[...],
                            preferred_element_type=jnp.float32)

    @pl.when(k == pl.num_programs(1) - 1)
    def _():
        # --- trunk tail: bias + LayerNorm + Tanh, all in f32 ---
        h = acc_ref[...] + b1_ref[...]
        mean = jnp.mean(h, axis=-1, keepdims=True)
        cent = h - mean
        var = jnp.mean(cent * cent, axis=-1, keepdims=True)
        h = cent * jax.lax.rsqrt(var + LN_EPS)
        h = jnp.tanh(h * g_ref[...] + beta_ref[...])

        # --- policy MLP: Linear -> ReLU -> Linear -> ReLU -> Linear -> Tanh ---
        z = jnp.dot(h.astype(w2_ref.dtype), w2_ref[...],
                    preferred_element_type=jnp.float32) + b2_ref[...]
        z = jnp.maximum(z, 0.0)
        z = jnp.dot(z.astype(w3_ref.dtype), w3_ref[...],
                    preferred_element_type=jnp.float32) + b3_ref[...]
        z = jnp.maximum(z, 0.0)
        mu = jnp.dot(z.astype(w4_ref.dtype), w4_ref[...],
                     preferred_element_type=jnp.float32) + b4_ref[...]
        mu_ref[...] = jnp.tanh(mu).astype(mu_ref.dtype)


def actor_forward(obs, params, std_scalar, *, tile_b=64, tile_k=128):
    """Returns (mu, std) exactly like Actor.forward_mu_std."""
    B, repr_dim = obs.shape
    feature_dim = params["w1"].shape[1]
    hidden_dim = params["w2"].shape[1]
    action_dim = params["w4"].shape[1]

    # Padded sizes: batch -> tile_b multiple, reduction dim -> tile_k multiple,
    # action dim -> lane-dense multiple of 128 (padded cols are tanh(0)=0 and
    # get sliced off below).
    bp = _round_up(B, tile_b)
    kp = _round_up(repr_dim, tile_k)
    ap = _round_up(action_dim, 128)

    cd = COMPUTE_DTYPE
    f32 = jnp.float32
    obs_p = jnp.zeros((bp, kp), cd).at[:B, :repr_dim].set(obs.astype(cd))
    w1_p = jnp.zeros((kp, feature_dim), cd).at[:repr_dim, :].set(
        params["w1"].astype(cd))
    w4_p = jnp.zeros((hidden_dim, ap), cd).at[:, :action_dim].set(
        params["w4"].astype(cd))
    b4_p = jnp.zeros((1, ap), f32).at[:, :action_dim].set(
        params["b4"].astype(f32))

    w2 = params["w2"].astype(cd)
    w3 = params["w3"].astype(cd)
    b1 = params["b1"].astype(f32)
    ln_g = params["ln_g"].astype(f32)
    ln_b = params["ln_b"].astype(f32)
    b2 = params["b2"].astype(f32)
    b3 = params["b3"].astype(f32)

    def vmem_resident():
        # Whole array kept VMEM-resident across the grid, single-buffered.
        return pl.BlockSpec(memory_space=pltpu.MemorySpace.VMEM)

    grid = (bp // tile_b, kp // tile_k)

    in_specs = [
        pl.BlockSpec((tile_b, tile_k), lambda i, k: (i, k)),        # obs tile
        pl.BlockSpec((tile_k, feature_dim), lambda i, k: (k, 0)),   # w1 K-tile
        vmem_resident(),  # b1
        vmem_resident(),  # ln_g
        vmem_resident(),  # ln_b
        vmem_resident(),  # w2
        vmem_resident(),  # b2
        vmem_resident(),  # w3
        vmem_resident(),  # b3
        vmem_resident(),  # w4 (lane-padded)
        vmem_resident(),  # b4 (lane-padded)
    ]
    out_specs = pl.BlockSpec((tile_b, ap), lambda i, k: (i, 0))
    out_shape = jax.ShapeDtypeStruct((bp, ap), f32)

    mu_padded = pl.pallas_call(
        actor_kernel,
        grid=grid,
        in_specs=in_specs,
        out_specs=out_specs,
        out_shape=out_shape,
        scratch_shapes=[pltpu.VMEM((tile_b, feature_dim), f32)],
        compiler_params=pltpu.CompilerParams(
            dimension_semantics=("parallel", "arbitrary"),
            vmem_limit_bytes=32 * 1024 * 1024),
    )(obs_p, w1_p, b1, ln_g, ln_b, w2, b2, w3, b3, w4_p, b4_p)

    mu = mu_padded[:B, :action_dim]
    # std is a constant broadcast; no need to burn a kernel output on it.
    std = jnp.full((B, action_dim), std_scalar, dtype=mu.dtype)
    return mu, std


def init_params(key, repr_dim, feature_dim, hidden_dim, action_dim):
    """Deterministic synthetic init (shapes match the PyTorch module).
    Weights are stored [in, out] (transposed vs nn.Linear)."""
    ks = jax.random.split(key, 8)
    s = 0.05

    def w(k, shape):
        return jax.random.normal(k, shape, dtype=jnp.float32) * s

    return {
        "w1": w(ks[0], (repr_dim, feature_dim)),
        "b1": w(ks[1], (1, feature_dim)),
        "ln_g": jnp.ones((1, feature_dim), jnp.float32),
        "ln_b": jnp.zeros((1, feature_dim), jnp.float32),
        "w2": w(ks[2], (feature_dim, hidden_dim)),
        "b2": w(ks[3], (1, hidden_dim)),
        "w3": w(ks[4], (hidden_dim, hidden_dim)),
        "b3": w(ks[5], (1, hidden_dim)),
        "w4": w(ks[6], (hidden_dim, action_dim)),
        "b4": w(ks[7], (1, action_dim)),
    }


def actor_ref(obs, p, std_scalar):
    """Pure-JAX reference mirroring the kernel's bf16-weight / f32-accum math."""
    cd = COMPUTE_DTYPE
    h = jnp.dot(obs.astype(cd), p["w1"].astype(cd),
                preferred_element_type=jnp.float32) + p["b1"]
    mean = jnp.mean(h, axis=-1, keepdims=True)
    var = jnp.mean((h - mean) ** 2, axis=-1, keepdims=True)
    h = (h - mean) * jax.lax.rsqrt(var + LN_EPS)
    h = jnp.tanh(h * p["ln_g"] + p["ln_b"])
    z = jnp.dot(h.astype(cd), p["w2"].astype(cd),
                preferred_element_type=jnp.float32) + p["b2"]
    z = jnp.maximum(z, 0.0)
    z = jnp.dot(z.astype(cd), p["w3"].astype(cd),
                preferred_element_type=jnp.float32) + p["b3"]
    z = jnp.maximum(z, 0.0)
    mu = jnp.tanh(jnp.dot(z.astype(cd), p["w4"].astype(cd),
                          preferred_element_type=jnp.float32) + p["b4"])
    return mu, jnp.full_like(mu, std_scalar)


if __name__ == "__main__":
    # Small but TPU-tile-friendly shapes consistent with the module's forward.
    batch, repr_dim, feature_dim, hidden_dim, action_dim = 128, 256, 128, 128, 4
    std_scalar = 0.2

    key = jax.random.PRNGKey(0)
    k_obs, k_par = jax.random.split(key)
    obs = jax.random.normal(k_obs, (batch, repr_dim), dtype=jnp.float32)
    params = init_params(k_par, repr_dim, feature_dim, hidden_dim, action_dim)

    mu, std = actor_forward(obs, params, std_scalar)
    jax.block_until_ready((mu, std))

    mu_r, std_r = actor_ref(obs, params, std_scalar)
    assert mu.shape == (batch, action_dim) and std.shape == (batch, action_dim)
    assert jnp.allclose(mu, mu_r, atol=1e-3, rtol=1e-3), \
        float(jnp.max(jnp.abs(mu - mu_r)))
    assert jnp.allclose(std, std_r, atol=1e-6)

    print("KERNEL_OK")
</pallas_src>

<mosaic_0001>
module attributes {stable_mosaic.version = 11 : i64} {
  func.func @actor_kernel(%arg0: i32, %arg1: i32, %arg2: memref<64x128xbf16, #tpu.memory_space<vmem>>, %arg3: memref<128x128xbf16, #tpu.memory_space<vmem>>, %arg4: memref<1x128xf32, #tpu.memory_space<vmem>>, %arg5: memref<1x128xf32, #tpu.memory_space<vmem>>, %arg6: memref<1x128xf32, #tpu.memory_space<vmem>>, %arg7: memref<128x128xbf16, #tpu.memory_space<vmem>>, %arg8: memref<1x128xf32, #tpu.memory_space<vmem>>, %arg9: memref<128x128xbf16, #tpu.memory_space<vmem>>, %arg10: memref<1x128xf32, #tpu.memory_space<vmem>>, %arg11: memref<128x128xbf16, #tpu.memory_space<vmem>>, %arg12: memref<1x128xf32, #tpu.memory_space<vmem>>, %arg13: memref<64x128xf32, #tpu.memory_space<vmem>>, %arg14: memref<64x128xf32, #tpu.memory_space<vmem>>) attributes {dimension_semantics = [#tpu.dimension_semantics<parallel>, #tpu.dimension_semantics<arbitrary>], iteration_bounds = array<i64: 2, 2>, scalar_prefetch = 0 : i64, scratch_operands = 1 : i64, tpu.core_type = #tpu.core_type<tc>, window_params = [{transform_indices = @transform_0, window_bounds = array<i64: 64, 128>}, {transform_indices = @transform_1, window_bounds = array<i64: 128, 128>}, {pipeline_mode = #tpu.pipeline_mode<synchronous>, transform_indices = @transform_2, window_bounds = array<i64: 1, 128>}, {pipeline_mode = #tpu.pipeline_mode<synchronous>, transform_indices = @transform_3, window_bounds = array<i64: 1, 128>}, {pipeline_mode = #tpu.pipeline_mode<synchronous>, transform_indices = @transform_4, window_bounds = array<i64: 1, 128>}, {pipeline_mode = #tpu.pipeline_mode<synchronous>, transform_indices = @transform_5, window_bounds = array<i64: 128, 128>}, {pipeline_mode = #tpu.pipeline_mode<synchronous>, transform_indices = @transform_6, window_bounds = array<i64: 1, 128>}, {pipeline_mode = #tpu.pipeline_mode<synchronous>, transform_indices = @transform_7, window_bounds = array<i64: 128, 128>}, {pipeline_mode = #tpu.pipeline_mode<synchronous>, transform_indices = @transform_8, window_bounds = array<i64: 1, 128>}, {pipeline_mode = #tpu.pipeline_mode<synchronous>, transform_indices = @transform_9, window_bounds = array<i64: 128, 128>}, {pipeline_mode = #tpu.pipeline_mode<synchronous>, transform_indices = @transform_10, window_bounds = array<i64: 1, 128>}, {transform_indices = @transform_11, window_bounds = array<i64: 64, 128>}]} {
    %c0_i32 = arith.constant 0 : i32
    %0 = arith.cmpi eq, %arg1, %c0_i32 : i32
    %1 = arith.extui %0 : i1 to i32
    %c0_i32_0 = arith.constant 0 : i32
    %2 = arith.cmpi ne, %1, %c0_i32_0 : i32
    scf.if %2 {
      %cst_9 = arith.constant 0.000000e+00 : f32
      %12 = vector.broadcast %cst_9 : f32 to vector<64x128xf32>
      %c0_10 = arith.constant 0 : index
      %c0_11 = arith.constant 0 : index
      %13 = vector.load %arg14[%c0_10, %c0_11] : memref<64x128xf32, #tpu.memory_space<vmem>>, vector<64x128xf32>
      tpu.vector_store %arg14[%c0_10, %c0_11], %12 {strides = array<i32>} : memref<64x128xf32, #tpu.memory_space<vmem>>, vector<64x128xf32>,
    } else {
    }
    %c0 = arith.constant 0 : index
    %c0_1 = arith.constant 0 : index
    %3 = vector.load %arg14[%c0, %c0_1] : memref<64x128xf32, #tpu.memory_space<vmem>>, vector<64x128xf32>
    %c0_2 = arith.constant 0 : index
    %c0_3 = arith.constant 0 : index
    %4 = vector.load %arg2[%c0_2, %c0_3] : memref<64x128xbf16, #tpu.memory_space<vmem>>, vector<64x128xbf16>
    %c0_4 = arith.constant 0 : index
    %c0_5 = arith.constant 0 : index
    %5 = vector.load %arg3[%c0_4, %c0_5] : memref<128x128xbf16, #tpu.memory_space<vmem>>, vector<128x128xbf16>
    %cst = arith.constant dense<0.000000e+00> : vector<64x128xf32>
    %6 = tpu.matmul %4, %5, %cst {dimension_numbers = #tpu.dot_dimension_numbers<[1], [0], [0], [1], [0, 0, 1, 1], [], []>} : vector<64x128xbf16>, vector<128x128xbf16>, vector<64x128xf32> -> vector<64x128xf32>
    %7 = arith.addf %3, %6 : vector<64x128xf32>
    %c0_6 = arith.constant 0 : index
    %c0_7 = arith.constant 0 : index
    %8 = vector.load %arg14[%c0_6, %c0_7] : memref<64x128xf32, #tpu.memory_space<vmem>>, vector<64x128xf32>
    tpu.vector_store %arg14[%c0_6, %c0_7], %7 {strides = array<i32>} : memref<64x128xf32, #tpu.memory_space<vmem>>, vector<64x128xf32>,
    %c1_i32 = arith.constant 1 : i32
    %9 = arith.cmpi eq, %arg1, %c1_i32 : i32
    %10 = arith.extui %9 : i1 to i32
    %c0_i32_8 = arith.constant 0 : i32
    %11 = arith.cmpi ne, %10, %c0_i32_8 : i32
    scf.if %11 {
      %c0_9 = arith.constant 0 : index
      %c0_10 = arith.constant 0 : index
      %12 = vector.load %arg14[%c0_9, %c0_10] : memref<64x128xf32, #tpu.memory_space<vmem>>, vector<64x128xf32>
      %c0_11 = arith.constant 0 : index
      %c0_12 = arith.constant 0 : index
      %13 = vector.load %arg4[%c0_11, %c0_12] : memref<1x128xf32, #tpu.memory_space<vmem>>, vector<1x128xf32>
      %14 = vector.broadcast %13 : vector<1x128xf32> to vector<64x128xf32>
      %15 = arith.addf %12, %14 : vector<64x128xf32>
      %cst_13 = arith.constant dense<0.000000e+00> : vector<64xf32>
      %16 = vector.multi_reduction <add>, %15, %cst_13 [1] : vector<64x128xf32> to vector<64xf32>
      %17 = vector.shape_cast %16 : vector<64xf32> to vector<64x1xf32>
      %cst_14 = arith.constant 1.280000e+02 : f32
      %18 = vector.broadcast %cst_14 : f32 to vector<64x1xf32>
      %19 = arith.divf %17, %18 : vector<64x1xf32>
      %20 = vector.broadcast %19 : vector<64x1xf32> to vector<64x128xf32>
      %21 = arith.subf %15, %20 : vector<64x128xf32>
      %22 = arith.mulf %21, %21 : vector<64x128xf32>
      %cst_15 = arith.constant dense<0.000000e+00> : vector<64xf32>
      %23 = vector.multi_reduction <add>, %22, %cst_15 [1] : vector<64x128xf32> to vector<64xf32>
      %24 = vector.shape_cast %23 : vector<64xf32> to vector<64x1xf32>
      %cst_16 = arith.constant 1.280000e+02 : f32
      %25 = vector.broadcast %cst_16 : f32 to vector<64x1xf32>
      %26 = arith.divf %24, %25 : vector<64x1xf32>
      %cst_17 = arith.constant 9.99999974E-6 : f32
      %27 = vector.broadcast %cst_17 : f32 to vector<64x1xf32>
      %28 = arith.addf %26, %27 : vector<64x1xf32>
      %29 = math.rsqrt %28 : vector<64x1xf32>
      %30 = vector.broadcast %29 : vector<64x1xf32> to vector<64x128xf32>
      %31 = arith.mulf %21, %30 : vector<64x128xf32>
      %c0_18 = arith.constant 0 : index
      %c0_19 = arith.constant 0 : index
      %32 = vector.load %arg5[%c0_18, %c0_19] : memref<1x128xf32, #tpu.memory_space<vmem>>, vector<1x128xf32>
      %33 = vector.broadcast %32 : vector<1x128xf32> to vector<64x128xf32>
      %34 = arith.mulf %31, %33 : vector<64x128xf32>
      %c0_20 = arith.constant 0 : index
      %c0_21 = arith.constant 0 : index
      %35 = vector.load %arg6[%c0_20, %c0_21] : memref<1x128xf32, #tpu.memory_space<vmem>>, vector<1x128xf32>
      %36 = vector.broadcast %35 : vector<1x128xf32> to vector<64x128xf32>
      %37 = arith.addf %34, %36 : vector<64x128xf32>
      %38 = math.tanh %37 : vector<64x128xf32>
      %39 = arith.truncf %38 : vector<64x128xf32> to vector<64x128xbf16>
      %c0_22 = arith.constant 0 : index
      %c0_23 = arith.constant 0 : index
      %40 = vector.load %arg7[%c0_22, %c0_23] : memref<128x128xbf16, #tpu.memory_space<vmem>>, vector<128x128xbf16>
      %cst_24 = arith.constant dense<0.000000e+00> : vector<64x128xf32>
      %41 = tpu.matmul %39, %40, %cst_24 {dimension_numbers = #tpu.dot_dimension_numbers<[1], [0], [0], [1], [0, 0, 1, 1], [], []>} : vector<64x128xbf16>, vector<128x128xbf16>, vector<64x128xf32> -> vector<64x128xf32>
      %c0_25 = arith.constant 0 : index
      %c0_26 = arith.constant 0 : index
      %42 = vector.load %arg8[%c0_25, %c0_26] : memref<1x128xf32, #tpu.memory_space<vmem>>, vector<1x128xf32>
      %43 = vector.broadcast %42 : vector<1x128xf32> to vector<64x128xf32>
      %44 = arith.addf %41, %43 : vector<64x128xf32>
      %cst_27 = arith.constant 0.000000e+00 : f32
      %45 = vector.broadcast %cst_27 : f32 to vector<64x128xf32>
      %46 = arith.maximumf %44, %45 : vector<64x128xf32>
      %47 = arith.truncf %46 : vector<64x128xf32> to vector<64x128xbf16>
      %c0_28 = arith.constant 0 : index
      %c0_29 = arith.constant 0 : index
      %48 = vector.load %arg9[%c0_28, %c0_29] : memref<128x128xbf16, #tpu.memory_space<vmem>>, vector<128x128xbf16>
      %cst_30 = arith.constant dense<0.000000e+00> : vector<64x128xf32>
      %49 = tpu.matmul %47, %48, %cst_30 {dimension_numbers = #tpu.dot_dimension_numbers<[1], [0], [0], [1], [0, 0, 1, 1], [], []>} : vector<64x128xbf16>, vector<128x128xbf16>, vector<64x128xf32> -> vector<64x128xf32>
      %c0_31 = arith.constant 0 : index
      %c0_32 = arith.constant 0 : index
      %50 = vector.load %arg10[%c0_31, %c0_32] : memref<1x128xf32, #tpu.memory_space<vmem>>, vector<1x128xf32>
      %51 = vector.broadcast %50 : vector<1x128xf32> to vector<64x128xf32>
      %52 = arith.addf %49, %51 : vector<64x128xf32>
      %cst_33 = arith.constant 0.000000e+00 : f32
      %53 = vector.broadcast %cst_33 : f32 to vector<64x128xf32>
      %54 = arith.maximumf %52, %53 : vector<64x128xf32>
      %55 = arith.truncf %54 : vector<64x128xf32> to vector<64x128xbf16>
      %c0_34 = arith.constant 0 : index
      %c0_35 = arith.constant 0 : index
      %56 = vector.load %arg11[%c0_34, %c0_35] : memref<128x128xbf16, #tpu.memory_space<vmem>>, vector<128x128xbf16>
      %cst_36 = arith.constant dense<0.000000e+00> : vector<64x128xf32>
      %57 = tpu.matmul %55, %56, %cst_36 {dimension_numbers = #tpu.dot_dimension_numbers<[1], [0], [0], [1], [0, 0, 1, 1], [], []>} : vector<64x128xbf16>, vector<128x128xbf16>, vector<64x128xf32> -> vector<64x128xf32>
      %c0_37 = arith.constant 0 : index
      %c0_38 = arith.constant 0 : index
      %58 = vector.load %arg12[%c0_37, %c0_38] : memref<1x128xf32, #tpu.memory_space<vmem>>, vector<1x128xf32>
      %59 = vector.broadcast %58 : vector<1x128xf32> to vector<64x128xf32>
      %60 = arith.addf %57, %59 : vector<64x128xf32>
      %61 = math.tanh %60 : vector<64x128xf32>
      %c0_39 = arith.constant 0 : index
      %c0_40 = arith.constant 0 : index
      %62 = vector.load %arg13[%c0_39, %c0_40] : memref<64x128xf32, #tpu.memory_space<vmem>>, vector<64x128xf32>
      tpu.vector_store %arg13[%c0_39, %c0_40], %61 {strides = array<i32>} : memref<64x128xf32, #tpu.memory_space<vmem>>, vector<64x128xf32>,
    } else {
    }
    return
  }
  func.func @transform_0(%arg0: i32, %arg1: i32) -> (i32, i32) {
    %c0_i32 = arith.constant 0 : i32
    return %arg0, %arg1 : i32, i32
  }
  func.func @transform_1(%arg0: i32, %arg1: i32) -> (i32, i32) {
    %c0_i32 = arith.constant 0 : i32
    %c0_i32_0 = arith.constant 0 : i32
    return %arg1, %c0_i32 : i32, i32
  }
  func.func @transform_2(%arg0: i32, %arg1: i32) -> (i32, i32) {
    %c0_i32 = arith.constant 0 : i32
    %c0_i32_0 = arith.constant 0 : i32
    %c0_i32_1 = arith.constant 0 : i32
    return %c0_i32, %c0_i32_0 : i32, i32
  }
  func.func @transform_3(%arg0: i32, %arg1: i32) -> (i32, i32) {
    %c0_i32 = arith.constant 0 : i32
    %c0_i32_0 = arith.constant 0 : i32
    %c0_i32_1 = arith.constant 0 : i32
    return %c0_i32, %c0_i32_0 : i32, i32
  }
  func.func @transform_4(%arg0: i32, %arg1: i32) -> (i32, i32) {
    %c0_i32 = arith.constant 0 : i32
    %c0_i32_0 = arith.constant 0 : i32
    %c0_i32_1 = arith.constant 0 : i32
    return %c0_i32, %c0_i32_0 : i32, i32
  }
  func.func @transform_5(%arg0: i32, %arg1: i32) -> (i32, i32) {
    %c0_i32 = arith.constant 0 : i32
    %c0_i32_0 = arith.constant 0 : i32
    %c0_i32_1 = arith.constant 0 : i32
    return %c0_i32, %c0_i32_0 : i32, i32
  }
  func.func @transform_6(%arg0: i32, %arg1: i32) -> (i32, i32) {
    %c0_i32 = arith.constant 0 : i32
    %c0_i32_0 = arith.constant 0 : i32
    %c0_i32_1 = arith.constant 0 : i32
    return %c0_i32, %c0_i32_0 : i32, i32
  }
  func.func @transform_7(%arg0: i32, %arg1: i32) -> (i32, i32) {
    %c0_i32 = arith.constant 0 : i32
    %c0_i32_0 = arith.constant 0 : i32
    %c0_i32_1 = arith.constant 0 : i32
    return %c0_i32, %c0_i32_0 : i32, i32
  }
  func.func @transform_8(%arg0: i32, %arg1: i32) -> (i32, i32) {
    %c0_i32 = arith.constant 0 : i32
    %c0_i32_0 = arith.constant 0 : i32
    %c0_i32_1 = arith.constant 0 : i32
    return %c0_i32, %c0_i32_0 : i32, i32
  }
  func.func @transform_9(%arg0: i32, %arg1: i32) -> (i32, i32) {
    %c0_i32 = arith.constant 0 : i32
    %c0_i32_0 = arith.constant 0 : i32
    %c0_i32_1 = arith.constant 0 : i32
    return %c0_i32, %c0_i32_0 : i32, i32
  }
  func.func @transform_10(%arg0: i32, %arg1: i32) -> (i32, i32) {
    %c0_i32 = arith.constant 0 : i32
    %c0_i32_0 = arith.constant 0 : i32
    %c0_i32_1 = arith.constant 0 : i32
    return %c0_i32, %c0_i32_0 : i32, i32
  }
  func.func @transform_11(%arg0: i32, %arg1: i32) -> (i32, i32) {
    %c0_i32 = arith.constant 0 : i32
    %c0_i32_0 = arith.constant 0 : i32
    return %arg0, %c0_i32 : i32, i32
  }
}

</mosaic_0001>

<llo_original>
// kernel: tpu_custom_call.1
$region0: #{tpu_custom_call.1}
  #allocation0 [shape = 'u32[]', space=smem, size = 0x4, offset = 0x4, fixed_abs, tag = 'smem constant byte address 0x4 - core index']
  #allocation1 [shape = 'u32[72,128]{1,0:T(1,128)}', space=vmem, size = 0x9000, scoped, tag = 'internal scratch']
  #allocation2 [shape = 'f32[64,128]{1,0:T(8,128)}', space=vmem, size = 0x8000, scoped, tag = 'scratch operand']
  %s0 = inlined_call_operand.hbm [shape: bf16[128,256], index: 0, kind: input, shape index: {}]
  %s1 = inlined_call_operand.hbm [shape: bf16[256,128], index: 1, kind: input, shape index: {}]
  %s2 = inlined_call_operand.vmem [shape: f32[1,128], index: 2, kind: input, shape index: {}]
  %s3 = inlined_call_operand.vmem [shape: f32[1,128], index: 3, kind: input, shape index: {}]
  %s4 = inlined_call_operand.vmem [shape: f32[1,128], index: 4, kind: input, shape index: {}]
  %s5 = inlined_call_operand.hbm [shape: bf16[128,128], index: 5, kind: input, shape index: {}]
  %s6 = inlined_call_operand.vmem [shape: f32[1,128], index: 6, kind: input, shape index: {}]
  %s7 = inlined_call_operand.hbm [shape: bf16[128,128], index: 7, kind: input, shape index: {}]
  %s8 = inlined_call_operand.vmem [shape: f32[1,128], index: 8, kind: input, shape index: {}]
  %s9 = inlined_call_operand.hbm [shape: bf16[128,128], index: 9, kind: input, shape index: {}]
  %s10 = inlined_call_operand.vmem [shape: f32[1,128], index: 10, kind: input, shape index: {}]
  %s11 = inlined_call_operand.hbm [shape: f32[128,128], index: 11, kind: output, shape index: {}]
  %s12 = sld [smem:[#allocation0]]
  $region105: #{tpu_custom_call.1} parent=0
    _
  %s14 = ssub.s32 1, %s12
  %s15 = scalar_select 0, %s14, %s12
  $region1: #{tpu_custom_call.1} parent=0
    #allocation3 [shape = 'u8[32768]{0}', space=vmem, size = 0x8000, scoped, tag = 'input window, operand 0']
    #allocation4 [shape = 's32[2]{0}', space=sflag, size = 0x8, scoped, tag = 'scoped memory for tpu_custom_call.1']
    #allocation5 [shape = 's32[2]{0}', space=sflag, size = 0x8, scoped, tag = 'scoped memory for tpu_custom_call.1']
    #allocation6 [shape = 'u8[65536]{0}', space=vmem, size = 0x10000, scoped, tag = 'input window, operand 1']
    #allocation7 [shape = 's32[2]{0}', space=sflag, size = 0x8, scoped, tag = 'scoped memory for tpu_custom_call.1']
    #allocation8 [shape = 'u8[32768]{0}', space=vmem, size = 0x8000, scoped, tag = 'input window, operand 5, single buffered']
    #allocation9 [shape = 'u8[32768]{0}', space=vmem, size = 0x8000, scoped, tag = 'input window, operand 7, single buffered']
    #allocation10 [shape = 's32[1]{0}', space=sflag, size = 0x4, scoped, tag = 'scoped memory for tpu_custom_call.1']
    #allocation11 [shape = 'u8[32768]{0}', space=vmem, size = 0x8000, scoped, tag = 'input window, operand 9, single buffered']
    #allocation12 [shape = 'u8[65536]{0}', space=vmem, size = 0x10000, scoped, tag = 'output window, operand 0']
    %16 = vsyncpa [#allocation4], 0
    %s17 = scalar_lea.sflag [#allocation4], 1
    %18 = vsyncpa %s17, 0
    %19 = vsyncpa [#allocation7], 0
    %s20 = scalar_lea.sflag [#allocation7], 1
    %21 = vsyncpa %s20, 0
    %22 = vsyncpa [#allocation10], 0
    %23 = vsyncpa [#allocation5], 0
    %s24 = scalar_lea.sflag [#allocation5], 1
    %25 = vsyncpa %s24, 0
    loop: start=0, step=1, limit=6
    $region2: #{tpu_custom_call.1} parent=1 // loop_pre_header
      _
    $region3: #{tpu_custom_call.1} parent=1 // loop_header
      %s27 = sphi 0, %s31
      %p28 = scmp.ge.s32.totalorder %s27, 6
      %s34 = sphi 0, %s46
      %s35 = sphi 0, %s42
      %s36 = sphi 0, %s34
      %s37 = sphi 0, %s35
      %s38 = sphi 0, %s36
      %s39 = sphi 0, %s37
      %s51 = sphi 0, %s53
      %s54 = sphi 0, %s51
      %s55 = sphi 0, %s54
      %s71 = sphi 0, %s55
      %s77 = sphi 0, %s79
      %s80 = sphi 0, %s77
      %s81 = sphi 0, %s80
      %s97 = sphi 0, %s81
      %s101 = sphi 0, %s101
      %s103 = sphi 0, %s101
      %s104 = sphi 0, %s103
      %s118 = sphi 0, %s104
      %s122 = sphi 0, %s122
      %s124 = sphi 0, %s122
      %s125 = sphi 0, %s124
      %s139 = sphi 0, %s125
      %s143 = sphi 0, %s143
      %s145 = sphi 0, %s143
      %s146 = sphi 0, %s145
      %s160 = sphi 0, %s146
      %s164 = sphi 0, %s164
      %s166 = sphi 0, %s164
      %s167 = sphi 0, %s166
      %s181 = sphi 0, %s167
      %s185 = sphi 0, %s185
      %s187 = sphi 0, %s185
      %s188 = sphi 0, %s187
      %s202 = sphi 0, %s188
      %s206 = sphi 0, %s206
      %s208 = sphi 0, %s206
      %s209 = sphi 0, %s208
      %s223 = sphi 0, %s209
      %s227 = sphi 0, %s227
      %s229 = sphi 0, %s227
      %s230 = sphi 0, %s229
      %s244 = sphi 0, %s230
      %s248 = sphi 0, %s248
      %s250 = sphi 0, %s248
      %s251 = sphi 0, %s250
      %s265 = sphi 0, %s251
      %s269 = sphi 0, %s269
      %s271 = sphi 0, %s269
      %s272 = sphi 0, %s271
      %s286 = sphi 0, %s272
      %s292 = sphi 0, %s294
      %s295 = sphi 0, %s292
      %s296 = sphi 0, %s295
      %s312 = sphi 0, %s296
    $region4: #{tpu_custom_call.1} parent=1 // loop_header_branch
      %30 = sbr.rel (%p28) target = $region8
    $region5: #{tpu_custom_call.1} parent=1 // loop_body
      %s32 = ssub.s32 %s27, 1
      %s33 = ssub.s32 %s27, 2
      %s40 = sadd.s32 1, %s35
      %p41 = scmp.ge.s32.totalorder %s40, 2
      %s42 = scalar_select %p41, 0, %s40
      %s43 = sadd.s32 1, %s34
      %s44 = scalar_select %p41, %s43, %s34
      %p45 = scmp.ge.s32.totalorder %s44, 2
      %s46 = scalar_select %p45, 0, %s44
      %s47 = ssub.s32 %s34, %s46
      %s48 = ssub.s32 %s35, %s42
      %s49 = sor.u32 %s47, %s48
      %p50 = scmp.eq.s32.totalorder %s49, 0
      %s52 = sadd.s32 %s51, 1
      %s53 = scalar_select %p50, %s51, %s52
      %p56 = pneg %p50
      %p57 = scmp.eq.s32.totalorder %s27, 3
      %p58 = por %p56, %p57
      %p59 = scmp.ne.s32.totalorder %s51, %s54
      %p60 = scmp.eq.s32.totalorder %s27, 0
      %p61 = por %p59, %p60
      %p62 = scmp.ne.s32.totalorder %s51, %s54
      %p63 = scmp.eq.s32.totalorder %s32, 3
      %p64 = por %p62, %p63
      %p65 = scmp.ne.s32.totalorder %s54, %s55
      %p66 = scmp.eq.s32.totalorder %s32, 0
      %p67 = por %p65, %p66
      %p68 = scmp.ne.s32.totalorder %s54, %s55
      %p69 = scmp.eq.s32.totalorder %s33, 3
      %p70 = por %p68, %p69
      %p72 = scmp.ne.s32.totalorder %s55, %s71
      %p73 = scmp.eq.s32.totalorder %s33, 0
      %p74 = por %p72, %p73
      %s75 = ssub.s32 %s35, %s42
      %p76 = scmp.eq.s32.totalorder %s75, 0
      %s78 = sadd.s32 %s77, 1
      %s79 = scalar_select %p76, %s77, %s78
      %p82 = pneg %p76
      %p83 = scmp.eq.s32.totalorder %s27, 3
      %p84 = por %p82, %p83
      %p85 = scmp.ne.s32.totalorder %s77, %s80
      %p86 = scmp.eq.s32.totalorder %s27, 0
      %p87 = por %p85, %p86
      %p88 = scmp.ne.s32.totalorder %s77, %s80
      %p89 = scmp.eq.s32.totalorder %s32, 3
      %p90 = por %p88, %p89
      %p91 = scmp.ne.s32.totalorder %s80, %s81
      %p92 = scmp.eq.s32.totalorder %s32, 0
      %p93 = por %p91, %p92
      %p94 = scmp.ne.s32.totalorder %s80, %s81
      %p95 = scmp.eq.s32.totalorder %s33, 3
      %p96 = por %p94, %p95
      %p98 = scmp.ne.s32.totalorder %s81, %s97
      %p99 = scmp.eq.s32.totalorder %s33, 0
      %p100 = por %p98, %p99
      %s102 = sadd.s32 %s101, 1
      %p105 = scmp.eq.s32.totalorder %s27, 3
      %p106 = scmp.ne.s32.totalorder %s101, %s103
      %p107 = scmp.eq.s32.totalorder %s27, 0
      %p108 = por %p106, %p107
      %p109 = scmp.ne.s32.totalorder %s101, %s103
      %p110 = scmp.eq.s32.totalorder %s32, 3
      %p111 = por %p109, %p110
      %p112 = scmp.ne.s32.totalorder %s103, %s104
      %p113 = scmp.eq.s32.totalorder %s32, 0
      %p114 = por %p112, %p113
      %p115 = scmp.ne.s32.totalorder %s103, %s104
      %p116 = scmp.eq.s32.totalorder %s33, 3
      %p117 = por %p115, %p116
      %p119 = scmp.ne.s32.totalorder %s104, %s118
      %p120 = scmp.eq.s32.totalorder %s33, 0
      %p121 = por %p119, %p120
      %s123 = sadd.s32 %s122, 1
      %p126 = scmp.eq.s32.totalorder %s27, 3
      %p127 = scmp.ne.s32.totalorder %s122, %s124
      %p128 = scmp.eq.s32.totalorder %s27, 0
      %p129 = por %p127, %p128
      %p130 = scmp.ne.s32.totalorder %s122, %s124
      %p131 = scmp.eq.s32.totalorder %s32, 3
      %p132 = por %p130, %p131
      %p133 = scmp.ne.s32.totalorder %s124, %s125
      %p134 = scmp.eq.s32.totalorder %s32, 0
      %p135 = por %p133, %p134
      %p136 = scmp.ne.s32.totalorder %s124, %s125
      %p137 = scmp.eq.s32.totalorder %s33, 3
      %p138 = por %p136, %p137
      %p140 = scmp.ne.s32.totalorder %s125, %s139
      %p141 = scmp.eq.s32.totalorder %s33, 0
      %p142 = por %p140, %p141
      %s144 = sadd.s32 %s143, 1
      %p147 = scmp.eq.s32.totalorder %s27, 3
      %p148 = scmp.ne.s32.totalorder %s143, %s145
      %p149 = scmp.eq.s32.totalorder %s27, 0
      %p150 = por %p148, %p149
      %p151 = scmp.ne.s32.totalorder %s143, %s145
      %p152 = scmp.eq.s32.totalorder %s32, 3
      %p153 = por %p151, %p152
      %p154 = scmp.ne.s32.totalorder %s145, %s146
      %p155 = scmp.eq.s32.totalorder %s32, 0
      %p156 = por %p154, %p155
      %p157 = scmp.ne.s32.totalorder %s145, %s146
      %p158 = scmp.eq.s32.totalorder %s33, 3
      %p159 = por %p157, %p158
      %p161 = scmp.ne.s32.totalorder %s146, %s160
      %p162 = scmp.eq.s32.totalorder %s33, 0
      %p163 = por %p161, %p162
      %s165 = sadd.s32 %s164, 1
      %p168 = scmp.eq.s32.totalorder %s27, 3
      %p169 = scmp.ne.s32.totalorder %s164, %s166
      %p170 = scmp.eq.s32.totalorder %s27, 0
      %p171 = por %p169, %p170
      %p172 = scmp.ne.s32.totalorder %s164, %s166
      %p173 = scmp.eq.s32.totalorder %s32, 3
      %p174 = por %p172, %p173
      %p175 = scmp.ne.s32.totalorder %s166, %s167
      %p176 = scmp.eq.s32.totalorder %s32, 0
      %p177 = por %p175, %p176
      %p178 = scmp.ne.s32.totalorder %s166, %s167
      %p179 = scmp.eq.s32.totalorder %s33, 3
      %p180 = por %p178, %p179
      %p182 = scmp.ne.s32.totalorder %s167, %s181
      %p183 = scmp.eq.s32.totalorder %s33, 0
      %p184 = por %p182, %p183
      %s186 = sadd.s32 %s185, 1
      %p189 = scmp.eq.s32.totalorder %s27, 3
      %p190 = scmp.ne.s32.totalorder %s185, %s187
      %p191 = scmp.eq.s32.totalorder %s27, 0
      %p192 = por %p190, %p191
      %p193 = scmp.ne.s32.totalorder %s185, %s187
      %p194 = scmp.eq.s32.totalorder %s32, 3
      %p195 = por %p193, %p194
      %p196 = scmp.ne.s32.totalorder %s187, %s188
      %p197 = scmp.eq.s32.totalorder %s32, 0
      %p198 = por %p196, %p197
      %p199 = scmp.ne.s32.totalorder %s187, %s188
      %p200 = scmp.eq.s32.totalorder %s33, 3
      %p201 = por %p199, %p200
      %p203 = scmp.ne.s32.totalorder %s188, %s202
      %p204 = scmp.eq.s32.totalorder %s33, 0
      %p205 = por %p203, %p204
      %s207 = sadd.s32 %s206, 1
      %p210 = scmp.eq.s32.totalorder %s27, 3
      %p211 = scmp.ne.s32.totalorder %s206, %s208
      %p212 = scmp.eq.s32.totalorder %s27, 0
      %p213 = por %p211, %p212
      %p214 = scmp.ne.s32.totalorder %s206, %s208
      %p215 = scmp.eq.s32.totalorder %s32, 3
      %p216 = por %p214, %p215
      %p217 = scmp.ne.s32.totalorder %s208, %s209
      %p218 = scmp.eq.s32.totalorder %s32, 0
      %p219 = por %p217, %p218
      %p220 = scmp.ne.s32.totalorder %s208, %s209
      %p221 = scmp.eq.s32.totalorder %s33, 3
      %p222 = por %p220, %p221
      %p224 = scmp.ne.s32.totalorder %s209, %s223
      %p225 = scmp.eq.s32.totalorder %s33, 0
      %p226 = por %p224, %p225
      %s228 = sadd.s32 %s227, 1
      %p231 = scmp.eq.s32.totalorder %s27, 3
      %p232 = scmp.ne.s32.totalorder %s227, %s229
      %p233 = scmp.eq.s32.totalorder %s27, 0
      %p234 = por %p232, %p233
      %p235 = scmp.ne.s32.totalorder %s227, %s229
      %p236 = scmp.eq.s32.totalorder %s32, 3
      %p237 = por %p235, %p236
      %p238 = scmp.ne.s32.totalorder %s229, %s230
      %p239 = scmp.eq.s32.totalorder %s32, 0
      %p240 = por %p238, %p239
      %p241 = scmp.ne.s32.totalorder %s229, %s230
      %p242 = scmp.eq.s32.totalorder %s33, 3
      %p243 = por %p241, %p242
      %p245 = scmp.ne.s32.totalorder %s230, %s244
      %p246 = scmp.eq.s32.totalorder %s33, 0
      %p247 = por %p245, %p246
      %s249 = sadd.s32 %s248, 1
      %p252 = scmp.eq.s32.totalorder %s27, 3
      %p253 = scmp.ne.s32.totalorder %s248, %s250
      %p254 = scmp.eq.s32.totalorder %s27, 0
      %p255 = por %p253, %p254
      %p256 = scmp.ne.s32.totalorder %s248, %s250
      %p257 = scmp.eq.s32.totalorder %s32, 3
      %p258 = por %p256, %p257
      %p259 = scmp.ne.s32.totalorder %s250, %s251
      %p260 = scmp.eq.s32.totalorder %s32, 0
      %p261 = por %p259, %p260
      %p262 = scmp.ne.s32.totalorder %s250, %s251
      %p263 = scmp.eq.s32.totalorder %s33, 3
      %p264 = por %p262, %p263
      %p266 = scmp.ne.s32.totalorder %s251, %s265
      %p267 = scmp.eq.s32.totalorder %s33, 0
      %p268 = por %p266, %p267
      %s270 = sadd.s32 %s269, 1
      %p273 = scmp.eq.s32.totalorder %s27, 3
      %p274 = scmp.ne.s32.totalorder %s269, %s271
      %p275 = scmp.eq.s32.totalorder %s27, 0
      %p276 = por %p274, %p275
      %p277 = scmp.ne.s32.totalorder %s269, %s271
      %p278 = scmp.eq.s32.totalorder %s32, 3
      %p279 = por %p277, %p278
      %p280 = scmp.ne.s32.totalorder %s271, %s272
      %p281 = scmp.eq.s32.totalorder %s32, 0
      %p282 = por %p280, %p281
      %p283 = scmp.ne.s32.totalorder %s271, %s272
      %p284 = scmp.eq.s32.totalorder %s33, 3
      %p285 = por %p283, %p284
      %p287 = scmp.ne.s32.totalorder %s272, %s286
      %p288 = scmp.eq.s32.totalorder %s33, 0
      %p289 = por %p287, %p288
      %s290 = ssub.s32 %s34, %s46
      %p291 = scmp.eq.s32.totalorder %s290, 0
      %s293 = sadd.s32 %s292, 1
      %s294 = scalar_select %p291, %s292, %s293
      %p297 = pneg %p291
      %p298 = scmp.eq.s32.totalorder %s27, 3
      %p299 = por %p297, %p298
      %p300 = scmp.ne.s32.totalorder %s292, %s295
      %p301 = scmp.eq.s32.totalorder %s27, 0
      %p302 = por %p300, %p301
      %p303 = scmp.ne.s32.totalorder %s292, %s295
      %p304 = scmp.eq.s32.totalorder %s32, 3
      %p305 = por %p303, %p304
      %p306 = scmp.ne.s32.totalorder %s295, %s296
      %p307 = scmp.eq.s32.totalorder %s32, 0
      %p308 = por %p306, %p307
      %p309 = scmp.ne.s32.totalorder %s295, %s296
      %p310 = scmp.eq.s32.totalorder %s33, 3
      %p311 = por %p309, %p310
      %p313 = scmp.ne.s32.totalorder %s296, %s312
      %p314 = scmp.eq.s32.totalorder %s33, 0
      %p315 = por %p313, %p314
      %p316 = scmp.le.s32.totalorder 1, %s27
      %p317 = scmp.lt.s32.totalorder %s27, 5
      %p318 = pnand %p316, %p317
      %p319 = pneg %p318
      // Predicated region
      $region9: #{tpu_custom_call.1} parent=5 // pred_check
        _
      $region10: #{tpu_custom_call.1} parent=5 // pred_check_branch
        %321 = sbr.rel (%p318) target = $region12
      $region11: #{tpu_custom_call.1} parent=5 // pred_region
        %s322 = ssub.s32 %s27, 1
        // Predicated region
        $region13: #{tpu_custom_call.1} parent=11 // pred_check
          %p323 = pneg %p114
        $region14: #{tpu_custom_call.1} parent=11 // pred_check_branch
          %325 = sbr.rel (%p323) target = $region16
        $region15: #{tpu_custom_call.1} parent=11 // pred_region
          _
        $region16: #{tpu_custom_call.1} parent=11 // pred_fallthru
          _
        // Predicated region
        $region17: #{tpu_custom_call.1} parent=11 // pred_check
          %p326 = pneg %p135
        $region18: #{tpu_custom_call.1} parent=11 // pred_check_branch
          %328 = sbr.rel (%p326) target = $region20
        $region19: #{tpu_custom_call.1} parent=11 // pred_region
          _
        $region20: #{tpu_custom_call.1} parent=11 // pred_fallthru
          _
        // Predicated region
        $region21: #{tpu_custom_call.1} parent=11 // pred_check
          %p329 = pneg %p156
        $region22: #{tpu_custom_call.1} parent=11 // pred_check_branch
          %331 = sbr.rel (%p329) target = $region24
        $region23: #{tpu_custom_call.1} parent=11 // pred_region
          _
        $region24: #{tpu_custom_call.1} parent=11 // pred_fallthru
          _
        // Predicated region
        $region25: #{tpu_custom_call.1} parent=11 // pred_check
          %p332 = pneg %p177
        $region26: #{tpu_custom_call.1} parent=11 // pred_check_branch
          %334 = sbr.rel (%p332) target = $region28
        $region27: #{tpu_custom_call.1} parent=11 // pred_region
          %336 = vsyncadd [#allocation7], 0
          %s337 = sshll.u32 %s5, 4
          %s338 = int_to_ptr.hbm [resolvable:$true] %s337
          %s339 = sshll.u32 [#allocation8], 4
          %s340 = int_to_ptr.vmem [resolvable:$true] %s339
          %345 = dma.hbm_to_vmem [thread:$0]  %s338, 1024, %s340, [#allocation7], 64, 64, 4
        $region28: #{tpu_custom_call.1} parent=11 // pred_fallthru
          _
        // Predicated region
        $region29: #{tpu_custom_call.1} parent=11 // pred_check
          %p346 = pneg %p198
        $region30: #{tpu_custom_call.1} parent=11 // pred_check_branch
          %348 = sbr.rel (%p346) target = $region32
        $region31: #{tpu_custom_call.1} parent=11 // pred_region
          _
        $region32: #{tpu_custom_call.1} parent=11 // pred_fallthru
          _
        // Predicated region
        $region33: #{tpu_custom_call.1} parent=11 // pred_check
          %p349 = pneg %p219
        $region34: #{tpu_custom_call.1} parent=11 // pred_check_branch
          %351 = sbr.rel (%p349) target = $region36
        $region35: #{tpu_custom_call.1} parent=11 // pred_region
          %353 = vsyncadd [#allocation10], 0
          %s354 = sshll.u32 %s7, 4
          %s355 = int_to_ptr.hbm [resolvable:$true] %s354
          %s356 = sshll.u32 [#allocation9], 4
          %s357 = int_to_ptr.vmem [resolvable:$true] %s356
          %362 = dma.hbm_to_vmem [thread:$0]  %s355, 1024, %s357, [#allocation10], 64, 64, 4
        $region36: #{tpu_custom_call.1} parent=11 // pred_fallthru
          _
        // Predicated region
        $region37: #{tpu_custom_call.1} parent=11 // pred_check
          %p363 = pneg %p240
        $region38: #{tpu_custom_call.1} parent=11 // pred_check_branch
          %365 = sbr.rel (%p363) target = $region40
        $region39: #{tpu_custom_call.1} parent=11 // pred_region
          _
        $region40: #{tpu_custom_call.1} parent=11 // pred_fallthru
          _
        // Predicated region
        $region41: #{tpu_custom_call.1} parent=11 // pred_check
          %p366 = pneg %p261
        $region42: #{tpu_custom_call.1} parent=11 // pred_check_branch
          %368 = sbr.rel (%p366) target = $region44
        $region43: #{tpu_custom_call.1} parent=11 // pred_region
          %370 = vsyncadd [#allocation10], 0
          %s371 = sshll.u32 %s9, 4
          %s372 = int_to_ptr.hbm [resolvable:$true] %s371
          %s373 = sshll.u32 [#allocation11], 4
          %s374 = int_to_ptr.vmem [resolvable:$true] %s373
          %379 = dma.hbm_to_vmem [thread:$0]  %s372, 1024, %s374, [#allocation10], 64, 64, 4
        $region44: #{tpu_custom_call.1} parent=11 // pred_fallthru
          _
        // Predicated region
        $region45: #{tpu_custom_call.1} parent=11 // pred_check
          %p380 = pneg %p282
        $region46: #{tpu_custom_call.1} parent=11 // pred_check_branch
          %382 = sbr.rel (%p380) target = $region48
        $region47: #{tpu_custom_call.1} parent=11 // pred_region
          _
        $region48: #{tpu_custom_call.1} parent=11 // pred_fallthru
          _
      $region12: #{tpu_custom_call.1} parent=5 // pred_fallthru
        _
      %p383 = scmp.lt.s32.totalorder %s27, 4
      // Predicated region
      $region49: #{tpu_custom_call.1} parent=5 // pred_check
        %p384 = pneg %p383
      $region50: #{tpu_custom_call.1} parent=5 // pred_check_branch
        %386 = sbr.rel (%p384) target = $region52
      $region51: #{tpu_custom_call.1} parent=5 // pred_region
        // Predicated region
        $region53: #{tpu_custom_call.1} parent=51 // pred_check
          %p387 = pneg %p61
        $region54: #{tpu_custom_call.1} parent=51 // pred_check_branch
          %389 = sbr.rel (%p387) target = $region56
        $region55: #{tpu_custom_call.1} parent=51 // pred_region
          %s390 = sand.u32 %s51, 1
          %s391 = scalar_lea.sflag [#allocation4], %s390
          %s392 = sand.u32 %s51, 1
          %s393 = smul.addr %s392, 32
          %s394 = scalar_lea.vmem [#allocation3], %s393
          %s395 = smul.u32 8, %s34
          %397 = vsyncadd %s391, 0
          %s398 = smul.addr %s395, 2
          %s399 = sadd.s32 %s35, %s398
          %s400 = smul.addr %s399, 4
          %s401 = scalar_lea.hbm %s0, %s400
          %s402 = sshll.u32 %s401, 4
          %s403 = int_to_ptr.hbm [resolvable:$true] %s402
          %s404 = sshll.u32 %s394, 4
          %s405 = int_to_ptr.vmem [resolvable:$true] %s404
          %410 = dma.hbm_to_vmem [thread:$0]  %s403, 512, %s405, %s391, 128, 64, 4
        $region56: #{tpu_custom_call.1} parent=51 // pred_fallthru
          _
        // Predicated region
        $region57: #{tpu_custom_call.1} parent=51 // pred_check
          %p411 = pneg %p87
        $region58: #{tpu_custom_call.1} parent=51 // pred_check_branch
          %413 = sbr.rel (%p411) target = $region60
        $region59: #{tpu_custom_call.1} parent=51 // pred_region
          %s414 = sand.u32 %s27, 1
          %s415 = scalar_lea.sflag [#allocation7], %s414
          %s416 = sand.u32 %s77, 1
          %s417 = smul.addr %s416, 64
          %s418 = scalar_lea.vmem [#allocation6], %s417
          %s419 = smul.u32 16, %s35
          %421 = vsyncadd %s415, 0
          %s422 = smul.addr %s419, 4
          %s423 = scalar_lea.hbm %s1, %s422
          %s424 = sshll.u32 %s423, 4
          %s425 = int_to_ptr.hbm [resolvable:$true] %s424
          %s426 = sshll.u32 %s418, 4
          %s427 = int_to_ptr.vmem [resolvable:$true] %s426
          %432 = dma.hbm_to_vmem [thread:$0]  %s425, 1024, %s427, %s415, 64, 64, 4
        $region60: #{tpu_custom_call.1} parent=51 // pred_fallthru
          _
      $region52: #{tpu_custom_call.1} parent=5 // pred_fallthru
        _
      %p433 = scmp.le.s32.totalorder 1, %s27
      %p434 = scmp.lt.s32.totalorder %s27, 5
      %p435 = pnand %p433, %p434
      %p436 = pneg %p435
      // Predicated region
      $region61: #{tpu_custom_call.1} parent=5 // pred_check
        _
      $region62: #{tpu_custom_call.1} parent=5 // pred_check_branch
        %438 = sbr.rel (%p435) target = $region64
      $region63: #{tpu_custom_call.1} parent=5 // pred_region
        %s439 = ssub.s32 %s27, 1
        %s440 = sand.u32 %s54, 1
        %s441 = scalar_lea.sflag [#allocation4], %s440
        %s442 = sand.u32 %s54, 1
        %s443 = smul.addr %s442, 32
        %s444 = scalar_lea.vmem [#allocation3], %s443
        // Predicated region
        $region65: #{tpu_custom_call.1} parent=63 // pred_check
          %p445 = pneg %p67
        $region66: #{tpu_custom_call.1} parent=63 // pred_check_branch
          %447 = sbr.rel (%p445) target = $region68
        $region67: #{tpu_custom_call.1} parent=63 // pred_region
          %449 = dma.done %s441, 512
        $region68: #{tpu_custom_call.1} parent=63 // pred_fallthru
          _
        %s450 = sand.u32 %s32, 1
        %s451 = scalar_lea.sflag [#allocation7], %s450
        %s452 = sand.u32 %s80, 1
        %s453 = smul.addr %s452, 64
        %s454 = scalar_lea.vmem [#allocation6], %s453
        // Predicated region
        $region69: #{tpu_custom_call.1} parent=63 // pred_check
          %p455 = pneg %p93
        $region70: #{tpu_custom_call.1} parent=63 // pred_check_branch
          %457 = sbr.rel (%p455) target = $region72
        $region71: #{tpu_custom_call.1} parent=63 // pred_region
          %459 = dma.done %s451, 1024
        $region72: #{tpu_custom_call.1} parent=63 // pred_fallthru
          _
        // Predicated region
        $region73: #{tpu_custom_call.1} parent=63 // pred_check
          %p460 = pneg %p177
        $region74: #{tpu_custom_call.1} parent=63 // pred_check_branch
          %462 = sbr.rel (%p460) target = $region76
        $region75: #{tpu_custom_call.1} parent=63 // pred_region
          %464 = dma.done [#allocation7], 1024
        $region76: #{tpu_custom_call.1} parent=63 // pred_fallthru
          _
        // Predicated region
        $region77: #{tpu_custom_call.1} parent=63 // pred_check
          %p465 = pneg %p219
        $region78: #{tpu_custom_call.1} parent=63 // pred_check_branch
          %467 = sbr.rel (%p465) target = $region80
        $region79: #{tpu_custom_call.1} parent=63 // pred_region
          %469 = dma.done [#allocation10], 1024
        $region80: #{tpu_custom_call.1} parent=63 // pred_fallthru
          _
        // Predicated region
        $region81: #{tpu_custom_call.1} parent=63 // pred_check
          %p470 = pneg %p261
        $region82: #{tpu_custom_call.1} parent=63 // pred_check_branch
          %472 = sbr.rel (%p470) target = $region84
        $region83: #{tpu_custom_call.1} parent=63 // pred_region
          %474 = dma.done [#allocation10], 1024
        $region84: #{tpu_custom_call.1} parent=63 // pred_fallthru
          _
        %s475 = sand.u32 %s54, 1
        %s476 = scalar_lea.sflag [#allocation4], %s475
        %s477 = sand.u32 %s54, 1
        %s478 = smul.addr %s477, 32
        %s479 = scalar_lea.vmem [#allocation3], %s478
        %p480 = pneg %p67
        %p481 = pneg %p64
        %s482 = sand.u32 %s32, 1
        %s483 = scalar_lea.sflag [#allocation7], %s482
        %s484 = sand.u32 %s80, 1
        %s485 = smul.addr %s484, 64
        %s486 = scalar_lea.vmem [#allocation6], %s485
        %p487 = pneg %p93
        %p488 = pneg %p90
        %p489 = pneg %p114
        %p490 = pneg %p111
        %p491 = pneg %p135
        %p492 = pneg %p132
        %p493 = pneg %p156
        %p494 = pneg %p153
        %p495 = pneg %p177
        %p496 = pneg %p174
        %p497 = pneg %p198
        %p498 = pneg %p195
        %p499 = pneg %p219
        %p500 = pneg %p216
        %p501 = pneg %p240
        %p502 = pneg %p237
        %p503 = pneg %p261
        %p504 = pneg %p258
        %p505 = pneg %p282
        %p506 = pneg %p279
        %p507 = pneg %p308
        %p508 = pneg %p305
        %s509 = sand.u32 %s295, 1
        %s510 = scalar_lea.sflag [#allocation5], %s509
        %s511 = sand.u32 %s295, 1
        %s512 = smul.addr %s511, 64
        %s513 = scalar_lea.vmem [#allocation12], %s512
        %s514 = smul.u32 8, %s36
        %s515 = smul.u32 16, %s37
        %s516 = smul.u32 8, %s36
        %p517 = scmp.eq.s32.totalorder %s37, 0
        // Predicated region
        $region85: #{tpu_custom_call.1} parent=63 // pred_check
          %p518 = pneg %p517
        $region86: #{tpu_custom_call.1} parent=63 // pred_check_branch
          %520 = sbr.rel (%p518) target = $region88
        $region87: #{tpu_custom_call.1} parent=63 // pred_region
          %521 = vst [vmem:[#allocation2] sm:$0xff] 0.0
          %522 = vst [vmem:[#allocation2 + $0x8] sm:$0xff] 0.0
          %523 = vst [vmem:[#allocation2 + $0x10] sm:$0xff] 0.0
          %524 = vst [vmem:[#allocation2 + $0x18] sm:$0xff] 0.0
          %525 = vst [vmem:[#allocation2 + $0x20] sm:$0xff] 0.0
          %526 = vst [vmem:[#allocation2 + $0x28] sm:$0xff] 0.0
          %527 = vst [vmem:[#allocation2 + $0x30] sm:$0xff] 0.0
          %528 = vst [vmem:[#allocation2 + $0x38] sm:$0xff] 0.0
        $region88: #{tpu_custom_call.1} parent=63 // pred_fallthru
          _
        %v529 = vld [vmem:[#allocation2] sm:$0xff]
        %v530 = vld [vmem:[#allocation2 + $0x8] sm:$0xff]
        %v531 = vld [vmem:[#allocation2 + $0x10] sm:$0xff]
        %v532 = vld [vmem:[#allocation2 + $0x18] sm:$0xff]
        %v533 = vld [vmem:[#allocation2 + $0x20] sm:$0xff]
        %v534 = vld [vmem:[#allocation2 + $0x28] sm:$0xff]
        %v535 = vld [vmem:[#allocation2 + $0x30] sm:$0xff]
        %v536 = vld [vmem:[#allocation2 + $0x38] sm:$0xff]
        %v537 = vld [vmem:[%s444] sm:$0xf]
        %v538 = vld [vmem:[%s444 + $0x4] sm:$0xf]
        %v539 = vld [vmem:[%s444 + $0x8] sm:$0xf]
        %v540 = vld [vmem:[%s444 + $0xc] sm:$0xf]
        %v541 = vld [vmem:[%s444 + $0x10] sm:$0xf]
        %v542 = vld [vmem:[%s444 + $0x14] sm:$0xf]
        %v543 = vld [vmem:[%s444 + $0x18] sm:$0xf]
        %v544 = vld [vmem:[%s444 + $0x1c] sm:$0xf]
        %v545 = vld [vmem:[%s454] sm:$0xf]
        %v546 = vld [vmem:[%s454 + $0x4] sm:$0xf]
        %v547 = vld [vmem:[%s454 + $0x8] sm:$0xf]
        %v548 = vld [vmem:[%s454 + $0xc] sm:$0xf]
        %v549 = vld [vmem:[%s454 + $0x10] sm:$0xf]
        %v550 = vld [vmem:[%s454 + $0x14] sm:$0xf]
        %v551 = vld [vmem:[%s454 + $0x18] sm:$0xf]
        %v552 = vld [vmem:[%s454 + $0x1c] sm:$0xf]
        %v553 = vld [vmem:[%s454 + $0x20] sm:$0xf]
        %v554 = vld [vmem:[%s454 + $0x24] sm:$0xf]
        %v555 = vld [vmem:[%s454 + $0x28] sm:$0xf]
        %v556 = vld [vmem:[%s454 + $0x2c] sm:$0xf]
        %v557 = vld [vmem:[%s454 + $0x30] sm:$0xf]
        %v558 = vld [vmem:[%s454 + $0x34] sm:$0xf]
        %v559 = vld [vmem:[%s454 + $0x38] sm:$0xf]
        %v560 = vld [vmem:[%s454 + $0x3c] sm:$0xf]
        %v569 = vunpack.c.l.b16 %v537
        %v570 = vunpack.c.l.b16 %v538
        %v571 = vunpack.c.l.b16 %v539
        %v572 = vunpack.c.l.b16 %v540
        %v573 = vunpack.c.l.b16 %v541
        %v574 = vunpack.c.l.b16 %v542
        %v575 = vunpack.c.l.b16 %v543
        %v576 = vunpack.c.l.b16 %v544
        %v577 = vpack.c.b16 %v570, %v569
        %v578 = vpack.c.b16 %v572, %v571
        %v579 = vpack.c.b16 %v574, %v573
        %v580 = vpack.c.b16 %v576, %v575
        %v601 = vunpack.c.l.b16 %v545
        %v602 = vunpack.c.l.b16 %v546
        %v603 = vunpack.c.l.b16 %v547
        %v604 = vunpack.c.l.b16 %v548
        %v605 = vunpack.c.l.b16 %v549
        %v606 = vunpack.c.l.b16 %v550
        %v607 = vunpack.c.l.b16 %v551
        %v608 = vunpack.c.l.b16 %v552
        %v609 = vunpack.c.l.b16 %v553
        %v610 = vunpack.c.l.b16 %v554
        %v611 = vunpack.c.l.b16 %v555
        %v612 = vunpack.c.l.b16 %v556
        %v613 = vunpack.c.l.b16 %v557
        %v614 = vunpack.c.l.b16 %v558
        %v615 = vunpack.c.l.b16 %v559
        %v616 = vunpack.c.l.b16 %v560
        %v617 = vpack.c.b16 %v602, %v601
        %v618 = vpack.c.b16 %v604, %v603
        %v619 = vpack.c.b16 %v606, %v605
        %v620 = vpack.c.b16 %v608, %v607
        %v621 = vpack.c.b16 %v610, %v609
        %v622 = vpack.c.b16 %v612, %v611
        %v623 = vpack.c.b16 %v614, %v613
        %v624 = vpack.c.b16 %v616, %v615
        %633 = vmatpush.bf16.msra.mxu0 %v624
        %634 = vmatpush.bf16.msra.mxu0 %v623
        %635 = vmatpush.bf16.msra.mxu0 %v622
        %636 = vmatpush.bf16.msra.mxu0 %v621
        %637 = vmatpush.bf16.msra.mxu0 %v620
        %638 = vmatpush.bf16.msra.mxu0 %v619
        %639 = vmatpush.bf16.msra.mxu0 %v618
        %640 = vmatpush.bf16.msra.mxu0 %v617
        %641 = vmatmul.bf16.gmra.mxu0 %v577
        %v642 = vpop.f32.mrf.mxu0
        %v643 = vadd.f32 0.0, %v642
        %v644 = vpop.f32.mrf.mxu0
        %v645 = vadd.f32 0.0, %v644
        %646 = vmatmul.bf16.gmra.mxu0 %v578
        %v647 = vpop.f32.mrf.mxu0
        %v648 = vadd.f32 0.0, %v647
        %v649 = vpop.f32.mrf.mxu0
        %v650 = vadd.f32 0.0, %v649
        %651 = vmatmul.bf16.gmra.mxu0 %v579
        %v652 = vpop.f32.mrf.mxu0
        %v653 = vadd.f32 0.0, %v652
        %v654 = vpop.f32.mrf.mxu0
        %v655 = vadd.f32 0.0, %v654
        %656 = vmatmul.bf16.gmra.mxu0 %v580
        %v657 = vpop.f32.mrf.mxu0
        %v658 = vadd.f32 0.0, %v657
        %v659 = vpop.f32.mrf.mxu0
        %v660 = vadd.f32 0.0, %v659
        %661 = vdwg.mxu0
        %v662 = vadd.f32 %v529, %v643
        %v663 = vadd.f32 %v530, %v645
        %v664 = vadd.f32 %v531, %v648
        %v665 = vadd.f32 %v532, %v650
        %v666 = vadd.f32 %v533, %v653
        %v667 = vadd.f32 %v534, %v655
        %v668 = vadd.f32 %v535, %v658
        %v669 = vadd.f32 %v536, %v660
        %670 = vst [vmem:[#allocation2] sm:$0xff] %v662
        %671 = vst [vmem:[#allocation2 + $0x8] sm:$0xff] %v663
        %672 = vst [vmem:[#allocation2 + $0x10] sm:$0xff] %v664
        %673 = vst [vmem:[#allocation2 + $0x18] sm:$0xff] %v665
        %674 = vst [vmem:[#allocation2 + $0x20] sm:$0xff] %v666
        %675 = vst [vmem:[#allocation2 + $0x28] sm:$0xff] %v667
        %676 = vst [vmem:[#allocation2 + $0x30] sm:$0xff] %v668
        %677 = vst [vmem:[#allocation2 + $0x38] sm:$0xff] %v669
        %p678 = scmp.eq.s32.totalorder %s37, 1
        // Predicated region
        $region89: #{tpu_custom_call.1} parent=63 // pred_check
          %p679 = pneg %p678
        $region90: #{tpu_custom_call.1} parent=63 // pred_check_branch
          %681 = sbr.rel (%p679) target = $region92
        $region91: #{tpu_custom_call.1} parent=63 // pred_region
          %v682 = vld [vmem:[#allocation2] sm:$0xff]
          %v683 = vld [vmem:[#allocation2 + $0x8] sm:$0xff]
          %v684 = vld [vmem:[#allocation2 + $0x10] sm:$0xff]
          %v685 = vld [vmem:[#allocation2 + $0x18] sm:$0xff]
          %v686 = vld [vmem:[#allocation2 + $0x20] sm:$0xff]
          %v687 = vld [vmem:[#allocation2 + $0x28] sm:$0xff]
          %v688 = vld [vmem:[#allocation2 + $0x30] sm:$0xff]
          %v689 = vld [vmem:[#allocation2 + $0x38] sm:$0xff]
          %v690 = vld [vmem:[%s2] sm:$0x1]
          %v692 = vperm.slane %v690, 0
          %v694 = vadd.f32 %v682, %v692
          %v695 = vadd.f32 %v683, %v692
          %v696 = vadd.f32 %v684, %v692
          %v697 = vadd.f32 %v685, %v692
          %v698 = vadd.f32 %v686, %v692
          %v699 = vadd.f32 %v687, %v692
          %v700 = vadd.f32 %v688, %v692
          %v701 = vadd.f32 %v689, %v692
          %702 = vadd.xlane.f32.xlu0 %v694
          %v703 = vpop.xlane.xlu0 %702
          %704 = vadd.xlane.f32.xlu0 %v695
          %v705 = vpop.xlane.xlu0 %704
          %706 = vadd.xlane.f32.xlu0 %v696
          %v707 = vpop.xlane.xlu0 %706
          %708 = vadd.xlane.f32.xlu0 %v697
          %v709 = vpop.xlane.xlu0 %708
          %710 = vadd.xlane.f32.xlu0 %v698
          %v711 = vpop.xlane.xlu0 %710
          %712 = vadd.xlane.f32.xlu0 %v699
          %v713 = vpop.xlane.xlu0 %712
          %714 = vadd.xlane.f32.xlu0 %v700
          %v715 = vpop.xlane.xlu0 %714
          %716 = vadd.xlane.f32.xlu0 %v701
          %v717 = vpop.xlane.xlu0 %716
          %v718 = vrcp.pop 128.0
          %v719 = vmul.f32 128.0, %v718
          %v720 = vsub.f32 1.0, %v719
          %v721 = vmul.f32 %v718, %v720
          %v722 = vadd.f32 %v718, %v721
          %vm723 = vweird.f32 %v718
          %v724 = vsel %vm723, %v718, %v722
          %v725 = vmul.f32 %v703, %v724
          %v726 = vmul.f32 %v705, %v724
          %v727 = vmul.f32 %v707, %v724
          %v728 = vmul.f32 %v709, %v724
          %v729 = vmul.f32 %v711, %v724
          %v730 = vmul.f32 %v713, %v724
          %v731 = vmul.f32 %v715, %v724
          %v732 = vmul.f32 %v717, %v724
          %v733 = vsub.f32 %v694, %v725
          %v734 = vsub.f32 %v695, %v726
          %v735 = vsub.f32 %v696, %v727
          %v736 = vsub.f32 %v697, %v728
          %v737 = vsub.f32 %v698, %v729
          %v738 = vsub.f32 %v699, %v730
          %v739 = vsub.f32 %v700, %v731
          %v740 = vsub.f32 %v701, %v732
          %v741 = vmul.f32 %v733, %v733
          %v742 = vmul.f32 %v734, %v734
          %v743 = vmul.f32 %v735, %v735
          %v744 = vmul.f32 %v736, %v736
          %v745 = vmul.f32 %v737, %v737
          %v746 = vmul.f32 %v738, %v738
          %v747 = vmul.f32 %v739, %v739
          %v748 = vmul.f32 %v740, %v740
          %749 = vadd.xlane.f32.xlu0 %v741
          %v750 = vpop.xlane.xlu0 %749
          %751 = vadd.xlane.f32.xlu0 %v742
          %v752 = vpop.xlane.xlu0 %751
          %753 = vadd.xlane.f32.xlu0 %v743
          %v754 = vpop.xlane.xlu0 %753
          %755 = vadd.xlane.f32.xlu0 %v744
          %v756 = vpop.xlane.xlu0 %755
          %757 = vadd.xlane.f32.xlu0 %v745
          %v758 = vpop.xlane.xlu0 %757
          %759 = vadd.xlane.f32.xlu0 %v746
          %v760 = vpop.xlane.xlu0 %759
          %761 = vadd.xlane.f32.xlu0 %v747
          %v762 = vpop.xlane.xlu0 %761
          %763 = vadd.xlane.f32.xlu0 %v748
          %v764 = vpop.xlane.xlu0 %763
          %v765 = vmul.f32 %v750, %v724
          %v766 = vmul.f32 %v752, %v724
          %v767 = vmul.f32 %v754, %v724
          %v768 = vmul.f32 %v756, %v724
          %v769 = vmul.f32 %v758, %v724
          %v770 = vmul.f32 %v760, %v724
          %v771 = vmul.f32 %v762, %v724
          %v772 = vmul.f32 %v764, %v724
          %v773 = vadd.f32 %v765, 1e-05
          %v774 = vadd.f32 %v766, 1e-05
          %v775 = vadd.f32 %v767, 1e-05
          %v776 = vadd.f32 %v768, 1e-05
          %v777 = vadd.f32 %v769, 1e-05
          %v778 = vadd.f32 %v770, 1e-05
          %v779 = vadd.f32 %v771, 1e-05
          %v780 = vadd.f32 %v772, 1e-05
          %v781 = vrsqrt.pop %v773
          %v782 = vmul.f32 %v781, %v773
          %v783 = vmul.f32 %v782, %v781
          %v784 = vmul.f32 0.5, %v783
          %v785 = vsub.f32 1.5, %v784
          %v786 = vmul.f32 %v781, %v785
          %vm787 = vweird.f32 %v773
          %vm788 = vweird.f32 %v781
          %vm789 = vmor %vm787, %vm788
          %v790 = vsel %vm789, %v781, %v786
          %v791 = vrsqrt.pop %v774
          %v792 = vmul.f32 %v791, %v774
          %v793 = vmul.f32 %v792, %v791
          %v794 = vmul.f32 0.5, %v793
          %v795 = vsub.f32 1.5, %v794
          %v796 = vmul.f32 %v791, %v795
          %vm797 = vweird.f32 %v774
          %vm798 = vweird.f32 %v791
          %vm799 = vmor %vm797, %vm798
          %v800 = vsel %vm799, %v791, %v796
          %v801 = vrsqrt.pop %v775
          %v802 = vmul.f32 %v801, %v775
          %v803 = vmul.f32 %v802, %v801
          %v804 = vmul.f32 0.5, %v803
          %v805 = vsub.f32 1.5, %v804
          %v806 = vmul.f32 %v801, %v805
          %vm807 = vweird.f32 %v775
          %vm808 = vweird.f32 %v801
          %vm809 = vmor %vm807, %vm808
          %v810 = vsel %vm809, %v801, %v806
          %v811 = vrsqrt.pop %v776
          %v812 = vmul.f32 %v811, %v776
          %v813 = vmul.f32 %v812, %v811
          %v814 = vmul.f32 0.5, %v813
          %v815 = vsub.f32 1.5, %v814
          %v816 = vmul.f32 %v811, %v815
          %vm817 = vweird.f32 %v776
          %vm818 = vweird.f32 %v811
          %vm819 = vmor %vm817, %vm818
          %v820 = vsel %vm819, %v811, %v816
          %v821 = vrsqrt.pop %v777
          %v822 = vmul.f32 %v821, %v777
          %v823 = vmul.f32 %v822, %v821
          %v824 = vmul.f32 0.5, %v823
          %v825 = vsub.f32 1.5, %v824
          %v826 = vmul.f32 %v821, %v825
          %vm827 = vweird.f32 %v777
          %vm828 = vweird.f32 %v821
          %vm829 = vmor %vm827, %vm828
          %v830 = vsel %vm829, %v821, %v826
          %v831 = vrsqrt.pop %v778
          %v832 = vmul.f32 %v831, %v778
          %v833 = vmul.f32 %v832, %v831
          %v834 = vmul.f32 0.5, %v833
          %v835 = vsub.f32 1.5, %v834
          %v836 = vmul.f32 %v831, %v835
          %vm837 = vweird.f32 %v778
          %vm838 = vweird.f32 %v831
          %vm839 = vmor %vm837, %vm838
          %v840 = vsel %vm839, %v831, %v836
          %v841 = vrsqrt.pop %v779
          %v842 = vmul.f32 %v841, %v779
          %v843 = vmul.f32 %v842, %v841
          %v844 = vmul.f32 0.5, %v843
          %v845 = vsub.f32 1.5, %v844
          %v846 = vmul.f32 %v841, %v845
          %vm847 = vweird.f32 %v779
          %vm848 = vweird.f32 %v841
          %vm849 = vmor %vm847, %vm848
          %v850 = vsel %vm849, %v841, %v846
          %v851 = vrsqrt.pop %v780
          %v852 = vmul.f32 %v851, %v780
          %v853 = vmul.f32 %v852, %v851
          %v854 = vmul.f32 0.5, %v853
          %v855 = vsub.f32 1.5, %v854
          %v856 = vmul.f32 %v851, %v855
          %vm857 = vweird.f32 %v780
          %vm858 = vweird.f32 %v851
          %vm859 = vmor %vm857, %vm858
          %v860 = vsel %vm859, %v851, %v856
          %v861 = vmul.f32 %v733, %v790
          %v862 = vmul.f32 %v734, %v800
          %v863 = vmul.f32 %v735, %v810
          %v864 = vmul.f32 %v736, %v820
          %v865 = vmul.f32 %v737, %v830
          %v866 = vmul.f32 %v738, %v840
          %v867 = vmul.f32 %v739, %v850
          %v868 = vmul.f32 %v740, %v860
          %v869 = vld [vmem:[%s3] sm:$0x1]
          %v871 = vperm.slane %v869, 0
          %v873 = vmul.f32 %v861, %v871
          %v874 = vmul.f32 %v862, %v871
          %v875 = vmul.f32 %v863, %v871
          %v876 = vmul.f32 %v864, %v871
          %v877 = vmul.f32 %v865, %v871
          %v878 = vmul.f32 %v866, %v871
          %v879 = vmul.f32 %v867, %v871
          %v880 = vmul.f32 %v868, %v871
          %v881 = vld [vmem:[%s4] sm:$0x1]
          %v883 = vperm.slane %v881, 0
          %v885 = vadd.f32 %v873, %v883
          %v886 = vadd.f32 %v874, %v883
          %v887 = vadd.f32 %v875, %v883
          %v888 = vadd.f32 %v876, %v883
          %v889 = vadd.f32 %v877, %v883
          %v890 = vadd.f32 %v878, %v883
          %v891 = vadd.f32 %v879, %v883
          %v892 = vadd.f32 %v880, %v883
          %v893 = vtanh.pop %v885
          %v894 = vtanh.pop %v886
          %v895 = vtanh.pop %v887
          %v896 = vtanh.pop %v888
          %v897 = vtanh.pop %v889
          %v898 = vtanh.pop %v890
          %v899 = vtanh.pop %v891
          %v900 = vtanh.pop %v892
          %v901 = vpack.c.bf16 %v894, %v893
          %v902 = vpack.c.bf16 %v896, %v895
          %v903 = vpack.c.bf16 %v898, %v897
          %v904 = vpack.c.bf16 %v900, %v899
          %v905 = vld [vmem:[#allocation8] sm:$0xf]
          %v906 = vld [vmem:[#allocation8 + $0x4] sm:$0xf]
          %v907 = vld [vmem:[#allocation8 + $0x8] sm:$0xf]
          %v908 = vld [vmem:[#allocation8 + $0xc] sm:$0xf]
          %v909 = vld [vmem:[#allocation8 + $0x10] sm:$0xf]
          %v910 = vld [vmem:[#allocation8 + $0x14] sm:$0xf]
          %v911 = vld [vmem:[#allocation8 + $0x18] sm:$0xf]
          %v912 = vld [vmem:[#allocation8 + $0x1c] sm:$0xf]
          %v913 = vld [vmem:[#allocation8 + $0x20] sm:$0xf]
          %v914 = vld [vmem:[#allocation8 + $0x24] sm:$0xf]
          %v915 = vld [vmem:[#allocation8 + $0x28] sm:$0xf]
          %v916 = vld [vmem:[#allocation8 + $0x2c] sm:$0xf]
          %v917 = vld [vmem:[#allocation8 + $0x30] sm:$0xf]
          %v918 = vld [vmem:[#allocation8 + $0x34] sm:$0xf]
          %v919 = vld [vmem:[#allocation8 + $0x38] sm:$0xf]
          %v920 = vld [vmem:[#allocation8 + $0x3c] sm:$0xf]
          %v921 = vld [vmem:[%s6] sm:$0x1]
          %v923 = vperm.slane %v921, 0
          %v941 = vunpack.c.l.b16 %v905
          %v942 = vunpack.c.l.b16 %v906
          %v943 = vunpack.c.l.b16 %v907
          %v944 = vunpack.c.l.b16 %v908
          %v945 = vunpack.c.l.b16 %v909
          %v946 = vunpack.c.l.b16 %v910
          %v947 = vunpack.c.l.b16 %v911
          %v948 = vunpack.c.l.b16 %v912
          %v949 = vunpack.c.l.b16 %v913
          %v950 = vunpack.c.l.b16 %v914
          %v951 = vunpack.c.l.b16 %v915
          %v952 = vunpack.c.l.b16 %v916
          %v953 = vunpack.c.l.b16 %v917
          %v954 = vunpack.c.l.b16 %v918
          %v955 = vunpack.c.l.b16 %v919
          %v956 = vunpack.c.l.b16 %v920
          %v957 = vpack.c.b16 %v942, %v941
          %v958 = vpack.c.b16 %v944, %v943
          %v959 = vpack.c.b16 %v946, %v945
          %v960 = vpack.c.b16 %v948, %v947
          %v961 = vpack.c.b16 %v950, %v949
          %v962 = vpack.c.b16 %v952, %v951
          %v963 = vpack.c.b16 %v954, %v953
          %v964 = vpack.c.b16 %v956, %v955
          %973 = vmatpush.bf16.msra.mxu0 %v964
          %974 = vmatpush.bf16.msra.mxu0 %v963
          %975 = vmatpush.bf16.msra.mxu0 %v962
          %976 = vmatpush.bf16.msra.mxu0 %v961
          %977 = vmatpush.bf16.msra.mxu0 %v960
          %978 = vmatpush.bf16.msra.mxu0 %v959
          %979 = vmatpush.bf16.msra.mxu0 %v958
          %980 = vmatpush.bf16.msra.mxu0 %v957
          %981 = vmatmul.bf16.gmra.mxu0 %v901
          %v982 = vpop.f32.mrf.mxu0
          %v983 = vadd.f32 %v923, %v982
          %v984 = vpop.f32.mrf.mxu0
          %v985 = vadd.f32 %v923, %v984
          %986 = vmatmul.bf16.gmra.mxu0 %v902
          %v987 = vpop.f32.mrf.mxu0
          %v988 = vadd.f32 %v923, %v987
          %v989 = vpop.f32.mrf.mxu0
          %v990 = vadd.f32 %v923, %v989
          %991 = vmatmul.bf16.gmra.mxu0 %v903
          %v992 = vpop.f32.mrf.mxu0
          %v993 = vadd.f32 %v923, %v992
          %v994 = vpop.f32.mrf.mxu0
          %v995 = vadd.f32 %v923, %v994
          %996 = vmatmul.bf16.gmra.mxu0 %v904
          %v997 = vpop.f32.mrf.mxu0
          %v998 = vadd.f32 %v923, %v997
          %v999 = vpop.f32.mrf.mxu0
          %v1000 = vadd.f32 %v923, %v999
          %1001 = vdwg.mxu0
          %v1002 = vmax.f32 %v983, 0.0
          %v1003 = vmax.f32 %v985, 0.0
          %v1004 = vmax.f32 %v988, 0.0
          %v1005 = vmax.f32 %v990, 0.0
          %v1006 = vmax.f32 %v993, 0.0
          %v1007 = vmax.f32 %v995, 0.0
          %v1008 = vmax.f32 %v998, 0.0
          %v1009 = vmax.f32 %v1000, 0.0
          %v1010 = vpack.c.bf16 %v1003, %v1002
          %v1011 = vpack.c.bf16 %v1005, %v1004
          %v1012 = vpack.c.bf16 %v1007, %v1006
          %v1013 = vpack.c.bf16 %v1009, %v1008
          %v1014 = vld [vmem:[#allocation9] sm:$0xf]
          %v1015 = vld [vmem:[#allocation9 + $0x4] sm:$0xf]
          %v1016 = vld [vmem:[#allocation9 + $0x8] sm:$0xf]
          %v1017 = vld [vmem:[#allocation9 + $0xc] sm:$0xf]
          %v1018 = vld [vmem:[#allocation9 + $0x10] sm:$0xf]
          %v1019 = vld [vmem:[#allocation9 + $0x14] sm:$0xf]
          %v1020 = vld [vmem:[#allocation9 + $0x18] sm:$0xf]
          %v1021 = vld [vmem:[#allocation9 + $0x1c] sm:$0xf]
          %v1022 = vld [vmem:[#allocation9 + $0x20] sm:$0xf]
          %v1023 = vld [vmem:[#allocation9 + $0x24] sm:$0xf]
          %v1024 = vld [vmem:[#allocation9 + $0x28] sm:$0xf]
          %v1025 = vld [vmem:[#allocation9 + $0x2c] sm:$0xf]
          %v1026 = vld [vmem:[#allocation9 + $0x30] sm:$0xf]
          %v1027 = vld [vmem:[#allocation9 + $0x34] sm:$0xf]
          %v1028 = vld [vmem:[#allocation9 + $0x38] sm:$0xf]
          %v1029 = vld [vmem:[#allocation9 + $0x3c] sm:$0xf]
          %v1030 = vld [vmem:[%s8] sm:$0x1]
          %v1032 = vperm.slane %v1030, 0
          %v1050 = vunpack.c.l.b16 %v1014
          %v1051 = vunpack.c.l.b16 %v1015
          %v1052 = vunpack.c.l.b16 %v1016
          %v1053 = vunpack.c.l.b16 %v1017
          %v1054 = vunpack.c.l.b16 %v1018
          %v1055 = vunpack.c.l.b16 %v1019
          %v1056 = vunpack.c.l.b16 %v1020
          %v1057 = vunpack.c.l.b16 %v1021
          %v1058 = vunpack.c.l.b16 %v1022
          %v1059 = vunpack.c.l.b16 %v1023
          %v1060 = vunpack.c.l.b16 %v1024
          %v1061 = vunpack.c.l.b16 %v1025
          %v1062 = vunpack.c.l.b16 %v1026
          %v1063 = vunpack.c.l.b16 %v1027
          %v1064 = vunpack.c.l.b16 %v1028
          %v1065 = vunpack.c.l.b16 %v1029
          %v1066 = vpack.c.b16 %v1051, %v1050
          %v1067 = vpack.c.b16 %v1053, %v1052
          %v1068 = vpack.c.b16 %v1055, %v1054
          %v1069 = vpack.c.b16 %v1057, %v1056
          %v1070 = vpack.c.b16 %v1059, %v1058
          %v1071 = vpack.c.b16 %v1061, %v1060
          %v1072 = vpack.c.b16 %v1063, %v1062
          %v1073 = vpack.c.b16 %v1065, %v1064
          %1082 = vmatpush.bf16.msra.mxu0 %v1073
          %1083 = vmatpush.bf16.msra.mxu0 %v1072
          %1084 = vmatpush.bf16.msra.mxu0 %v1071
          %1085 = vmatpush.bf16.msra.mxu0 %v1070
          %1086 = vmatpush.bf16.msra.mxu0 %v1069
          %1087 = vmatpush.bf16.msra.mxu0 %v1068
          %1088 = vmatpush.bf16.msra.mxu0 %v1067
          %1089 = vmatpush.bf16.msra.mxu0 %v1066
          %1090 = vmatmul.bf16.gmra.mxu0 %v1010
          %v1091 = vpop.f32.mrf.mxu0
          %v1092 = vadd.f32 %v1032, %v1091
          %v1093 = vpop.f32.mrf.mxu0
          %v1094 = vadd.f32 %v1032, %v1093
          %1095 = vmatmul.bf16.gmra.mxu0 %v1011
          %v1096 = vpop.f32.mrf.mxu0
          %v1097 = vadd.f32 %v1032, %v1096
          %v1098 = vpop.f32.mrf.mxu0
          %v1099 = vadd.f32 %v1032, %v1098
          %1100 = vmatmul.bf16.gmra.mxu0 %v1012
          %v1101 = vpop.f32.mrf.mxu0
          %v1102 = vadd.f32 %v1032, %v1101
          %v1103 = vpop.f32.mrf.mxu0
          %v1104 = vadd.f32 %v1032, %v1103
          %1105 = vmatmul.bf16.gmra.mxu0 %v1013
          %v1106 = vpop.f32.mrf.mxu0
          %v1107 = vadd.f32 %v1032, %v1106
          %v1108 = vpop.f32.mrf.mxu0
          %v1109 = vadd.f32 %v1032, %v1108
          %1110 = vdwg.mxu0
          %v1111 = vmax.f32 %v1092, 0.0
          %v1112 = vmax.f32 %v1094, 0.0
          %v1113 = vmax.f32 %v1097, 0.0
          %v1114 = vmax.f32 %v1099, 0.0
          %v1115 = vmax.f32 %v1102, 0.0
          %v1116 = vmax.f32 %v1104, 0.0
          %v1117 = vmax.f32 %v1107, 0.0
          %v1118 = vmax.f32 %v1109, 0.0
          %v1119 = vpack.c.bf16 %v1112, %v1111
          %v1120 = vpack.c.bf16 %v1114, %v1113
          %v1121 = vpack.c.bf16 %v1116, %v1115
          %v1122 = vpack.c.bf16 %v1118, %v1117
          %v1123 = vld [vmem:[#allocation11] sm:$0xf]
          %v1124 = vld [vmem:[#allocation11 + $0x4] sm:$0xf]
          %v1125 = vld [vmem:[#allocation11 + $0x8] sm:$0xf]
          %v1126 = vld [vmem:[#allocation11 + $0xc] sm:$0xf]
          %v1127 = vld [vmem:[#allocation11 + $0x10] sm:$0xf]
          %v1128 = vld [vmem:[#allocation11 + $0x14] sm:$0xf]
          %v1129 = vld [vmem:[#allocation11 + $0x18] sm:$0xf]
          %v1130 = vld [vmem:[#allocation11 + $0x1c] sm:$0xf]
          %v1131 = vld [vmem:[#allocation11 + $0x20] sm:$0xf]
          %v1132 = vld [vmem:[#allocation11 + $0x24] sm:$0xf]
          %v1133 = vld [vmem:[#allocation11 + $0x28] sm:$0xf]
          %v1134 = vld [vmem:[#allocation11 + $0x2c] sm:$0xf]
          %v1135 = vld [vmem:[#allocation11 + $0x30] sm:$0xf]
          %v1136 = vld [vmem:[#allocation11 + $0x34] sm:$0xf]
          %v1137 = vld [vmem:[#allocation11 + $0x38] sm:$0xf]
          %v1138 = vld [vmem:[#allocation11 + $0x3c] sm:$0xf]
          %v1139 = vld [vmem:[%s10] sm:$0x1]
          %v1141 = vperm.slane %v1139, 0
          %v1159 = vunpack.c.l.b16 %v1123
          %v1160 = vunpack.c.l.b16 %v1124
          %v1161 = vunpack.c.l.b16 %v1125
          %v1162 = vunpack.c.l.b16 %v1126
          %v1163 = vunpack.c.l.b16 %v1127
          %v1164 = vunpack.c.l.b16 %v1128
          %v1165 = vunpack.c.l.b16 %v1129
          %v1166 = vunpack.c.l.b16 %v1130
          %v1167 = vunpack.c.l.b16 %v1131
          %v1168 = vunpack.c.l.b16 %v1132
          %v1169 = vunpack.c.l.b16 %v1133
          %v1170 = vunpack.c.l.b16 %v1134
          %v1171 = vunpack.c.l.b16 %v1135
          %v1172 = vunpack.c.l.b16 %v1136
          %v1173 = vunpack.c.l.b16 %v1137
          %v1174 = vunpack.c.l.b16 %v1138
          %v1175 = vpack.c.b16 %v1160, %v1159
          %v1176 = vpack.c.b16 %v1162, %v1161
          %v1177 = vpack.c.b16 %v1164, %v1163
          %v1178 = vpack.c.b16 %v1166, %v1165
          %v1179 = vpack.c.b16 %v1168, %v1167
          %v1180 = vpack.c.b16 %v1170, %v1169
          %v1181 = vpack.c.b16 %v1172, %v1171
          %v1182 = vpack.c.b16 %v1174, %v1173
          %1191 = vmatpush.bf16.msra.mxu0 %v1182
          %1192 = vmatpush.bf16.msra.mxu0 %v1181
          %1193 = vmatpush.bf16.msra.mxu0 %v1180
          %1194 = vmatpush.bf16.msra.mxu0 %v1179
          %1195 = vmatpush.bf16.msra.mxu0 %v1178
          %1196 = vmatpush.bf16.msra.mxu0 %v1177
          %1197 = vmatpush.bf16.msra.mxu0 %v1176
          %1198 = vmatpush.bf16.msra.mxu0 %v1175
          %1199 = vmatmul.bf16.gmra.mxu0 %v1119
          %v1200 = vpop.f32.mrf.mxu0
          %v1201 = vadd.f32 %v1141, %v1200
          %v1202 = vpop.f32.mrf.mxu0
          %v1203 = vadd.f32 %v1141, %v1202
          %1204 = vmatmul.bf16.gmra.mxu0 %v1120
          %v1205 = vpop.f32.mrf.mxu0
          %v1206 = vadd.f32 %v1141, %v1205
          %v1207 = vpop.f32.mrf.mxu0
          %v1208 = vadd.f32 %v1141, %v1207
          %1209 = vmatmul.bf16.gmra.mxu0 %v1121
          %v1210 = vpop.f32.mrf.mxu0
          %v1211 = vadd.f32 %v1141, %v1210
          %v1212 = vpop.f32.mrf.mxu0
          %v1213 = vadd.f32 %v1141, %v1212
          %1214 = vmatmul.bf16.gmra.mxu0 %v1122
          %v1215 = vpop.f32.mrf.mxu0
          %v1216 = vadd.f32 %v1141, %v1215
          %v1217 = vpop.f32.mrf.mxu0
          %v1218 = vadd.f32 %v1141, %v1217
          %1219 = vdwg.mxu0
          %v1220 = vtanh.pop %v1201
          %v1221 = vtanh.pop %v1203
          %v1222 = vtanh.pop %v1206
          %v1223 = vtanh.pop %v1208
          %v1224 = vtanh.pop %v1211
          %v1225 = vtanh.pop %v1213
          %v1226 = vtanh.pop %v1216
          %v1227 = vtanh.pop %v1218
          %1228 = vst [vmem:[%s513] sm:$0xff] %v1220
          %1229 = vst [vmem:[%s513 + $0x8] sm:$0xff] %v1221
          %1230 = vst [vmem:[%s513 + $0x10] sm:$0xff] %v1222
          %1231 = vst [vmem:[%s513 + $0x18] sm:$0xff] %v1223
          %1232 = vst [vmem:[%s513 + $0x20] sm:$0xff] %v1224
          %1233 = vst [vmem:[%s513 + $0x28] sm:$0xff] %v1225
          %1234 = vst [vmem:[%s513 + $0x30] sm:$0xff] %v1226
          %1235 = vst [vmem:[%s513 + $0x38] sm:$0xff] %v1227
        $region92: #{tpu_custom_call.1} parent=63 // pred_fallthru
          _
        %s1236 = sand.u32 %s295, 1
        %s1237 = scalar_lea.sflag [#allocation5], %s1236
        %s1238 = sand.u32 %s295, 1
        %s1239 = smul.addr %s1238, 64
        %s1240 = scalar_lea.vmem [#allocation12], %s1239
        // Predicated region
        $region93: #{tpu_custom_call.1} parent=63 // pred_check
          %p1241 = pneg %p305
        $region94: #{tpu_custom_call.1} parent=63 // pred_check_branch
          %1243 = sbr.rel (%p1241) target = $region96
        $region95: #{tpu_custom_call.1} parent=63 // pred_region
          %s1244 = smul.u32 8, %s36
          %1246 = vsyncadd %s1237, 0
          %s1247 = smul.addr %s1244, 8
          %s1248 = scalar_lea.hbm %s11, %s1247
          %s1249 = sshll.u32 %s1240, 4
          %s1250 = int_to_ptr.vmem [resolvable:$true] %s1249
          %s1251 = sshll.u32 %s1248, 4
          %s1252 = int_to_ptr.hbm [resolvable:$true] %s1251
          %1257 = dma.vmem_to_hbm [thread:$0]  %s1250, 1024, %s1252, %s1237, 128, 128, 8
        $region96: #{tpu_custom_call.1} parent=63 // pred_fallthru
          _
      $region64: #{tpu_custom_call.1} parent=5 // pred_fallthru
        _
      %p1258 = scmp.le.s32.totalorder 2, %s27
      // Predicated region
      $region97: #{tpu_custom_call.1} parent=5 // pred_check
        %p1259 = pneg %p1258
      $region98: #{tpu_custom_call.1} parent=5 // pred_check_branch
        %1261 = sbr.rel (%p1259) target = $region100
      $region99: #{tpu_custom_call.1} parent=5 // pred_region
        %s1262 = ssub.s32 %s27, 2
        // Predicated region
        $region101: #{tpu_custom_call.1} parent=99 // pred_check
          %p1263 = pneg %p311
        $region102: #{tpu_custom_call.1} parent=99 // pred_check_branch
          %1265 = sbr.rel (%p1263) target = $region104
        $region103: #{tpu_custom_call.1} parent=99 // pred_region
          %s1266 = sand.u32 %s296, 1
          %s1267 = scalar_lea.sflag [#allocation5], %s1266
          %s1268 = sand.u32 %s296, 1
          %s1269 = smul.addr %s1268, 64
          %s1270 = scalar_lea.vmem [#allocation12], %s1269
          %1272 = dma.done %s1267, 1024
        $region104: #{tpu_custom_call.1} parent=99 // pred_fallthru
          _
      $region100: #{tpu_custom_call.1} parent=5 // pred_fallthru
        _
    $region6: #{tpu_custom_call.1} parent=1 // loop_footer
      %s31 = sadd.s32 1, %s27
    $region7: #{tpu_custom_call.1} parent=1 // loop_footer_branch
      %26 = sbr.rel target = $region3
    $region8: #{tpu_custom_call.1} parent=1 // loop_exit
      _
    %1273 = vsyncpa [#allocation4], 1
    %s1274 = scalar_lea.sflag [#allocation4], 1
    %1275 = vsyncpa %s1274, 1
    %1276 = vsyncpa [#allocation7], 1
    %s1277 = scalar_lea.sflag [#allocation7], 1
    %1278 = vsyncpa %s1277, 1
    %1279 = vsyncpa [#allocation10], 1
    %1280 = vsyncpa [#allocation5], 1
    %s1281 = scalar_lea.sflag [#allocation5], 1
    %1282 = vsyncpa %s1281, 1

</llo_original>
